<compile_context>
chip_gen: v7x
topology: tpu7x:2x2x1
jax: 0.10.0
libtpu: 0.0.40
codegen_flags: <defaults>
</compile_context>

<pallas_src>
import functools

import jax
import jax.numpy as jnp
import numpy as np
from jax.experimental import pallas as pl
from jax.experimental.pallas import tpu as pltpu


def wavenet_block_kernel(x_ref, w1_ref, w2_ref, b_ref, res_ref, skip_ref, xs_sc,
                         *, c, t, d, g):
    """One grid step: `g` batch elements, full time extent.

    x_ref   : (g, C, T)      input
    w1_ref  : (2C, 2C)       [[Wf_tap1, Wf_tap0], [Wg_tap1, Wg_tap0]]
    w2_ref  : (2C, C)        [Wres; Wskip]
    b_ref   : (4C, 1)        [bf; bg; br; bs]
    res_ref : (g, C, T)      x + residual[..., :T]
    skip_ref: (g, C, T + d)  skip
    xs_sc   : (2C, T + d)    VMEM scratch staging both conv taps of x
    """
    L = t + d
    w1 = w1_ref[...]
    w2 = w2_ref[...]
    b = b_ref[...]
    bf = b[0 * c:1 * c]
    bg = b[1 * c:2 * c]
    br = b[2 * c:3 * c]
    bs = b[3 * c:4 * c]

    # Zero once per grid step: only the d padding columns of each half stay zero; the x
    # regions below are fully overwritten for every batch element in this tile.
    xs_sc[...] = jnp.zeros((2 * c, L), jnp.float32)

    for gi in range(g):
        x = x_ref[gi].astype(jnp.float32)                       # (C, T)
        # Dilated causal conv (kernel=2, padding=d) taps, staged side by side:
        #   rows [0,C)  : x at output position t       (tap k=1) -> cols [0, T),   rest 0
        #   rows [C,2C) : x at output position t - d   (tap k=0) -> cols [d, d+T), rest 0
        xs_sc[0:c, 0:t] = x
        xs_sc[c:2 * c, d:d + t] = x
        xs = xs_sc[...]                                          # (2C, L)

        # Both conv pre-activations in one MXU matmul.
        pre = jnp.dot(w1, xs, preferred_element_type=jnp.float32)      # (2C, L)
        filt_pre = pre[0:c] + bf
        gate_pre = pre[c:2 * c] + bg

        # sigmoid(v) = 0.5*tanh(0.5*v) + 0.5 -> tanh-only EUP path (no exp/div).
        z = jnp.tanh(filt_pre) * (0.5 * jnp.tanh(0.5 * gate_pre) + 0.5)  # (C, L)

        # Residual + skip in one MXU matmul.
        out = jnp.dot(w2, z, preferred_element_type=jnp.float32)       # (2C, L)
        # TODO(synk): PyTorch source does (x + residual)[:, :, :-dilation] with mismatched
        # lengths (T vs T+d), which would raise; we use the only consistent reading:
        # residual truncated to T before the add, skip kept at full length T + d.
        res_ref[gi] = (x + out[0:c, 0:t] + br).astype(res_ref.dtype)
        skip_ref[gi] = (out[c:2 * c] + bs).astype(skip_ref.dtype)


def wavenet_block(x, params, dilation):
    B, C, T = x.shape
    d = int(dilation)
    assert d >= 1, "Conv1d dilation must be >= 1"
    L = T + d

    # Stacked weights for the two in-kernel matmuls (tiny; stay resident in VMEM).
    wf = params["filter_w"].astype(jnp.float32)       # (C, C, 2), PyTorch (out, in, k)
    wg = params["gate_w"].astype(jnp.float32)
    w1 = jnp.concatenate(
        [jnp.concatenate([wf[:, :, 1], wf[:, :, 0]], axis=1),
         jnp.concatenate([wg[:, :, 1], wg[:, :, 0]], axis=1)], axis=0)          # (2C, 2C)
    w2 = jnp.concatenate(
        [params["residual_w"][:, :, 0], params["skip_w"][:, :, 0]],
        axis=0).astype(jnp.float32)                                              # (2C, C)
    b_all = jnp.concatenate(
        [params["filter_b"], params["gate_b"],
         params["residual_b"], params["skip_b"]],
        axis=0).astype(jnp.float32).reshape(4 * C, 1)                            # (4C, 1)

    # Generation-aware VMEM budget (v5e/v6e: 128 MiB physical, v7x: 64 MiB).
    try:
        cap = int(pltpu.get_tpu_info().vmem_capacity_bytes)
    except Exception:
        cap = 64 * 1024 * 1024
    vmem_limit = int(min((cap * 3) // 4, 100 * 1024 * 1024))

    # Batch elements per grid step: as many as the VMEM budget allows, but keep >= 2
    # (ideally >= 4) grid steps so the pipeline overlaps DMA/compute and v7x megacore can
    # shard the "parallel" axis.  B is padded with dummy zero elements rather than
    # collapsing to 1-element tiles when it is not divisible.
    per_elem = 4 * (4 * C * T + 16 * C * L)        # rough live-f32 bytes per batch element
    g_vmem = max(1, (vmem_limit // 2) // max(per_elem, 1))
    if B >= 8:
        g_pipe = B // 4
    elif B >= 2:
        g_pipe = B // 2
    else:
        g_pipe = 1
    G = int(max(1, min(g_vmem, g_pipe, B, 32)))    # 32 bounds the unrolled in-kernel loop
    n_steps = int(pl.cdiv(B, G))
    B_pad = n_steps * G
    x_in = x if B_pad == B else jnp.pad(x, ((0, B_pad - B), (0, 0), (0, 0)))

    kernel = functools.partial(wavenet_block_kernel, c=C, t=T, d=d, g=G)

    res, skip = pl.pallas_call(
        kernel,
        out_shape=(jax.ShapeDtypeStruct((B_pad, C, T), x.dtype),
                   jax.ShapeDtypeStruct((B_pad, C, L), x.dtype)),
        grid_spec=pltpu.PrefetchScalarGridSpec(
            num_scalar_prefetch=0,
            grid=(n_steps,),
            in_specs=[pl.BlockSpec((G, C, T), lambda i: (i, 0, 0)),
                      pl.BlockSpec((2 * C, 2 * C), lambda i: (0, 0)),
                      pl.BlockSpec((2 * C, C), lambda i: (0, 0)),
                      pl.BlockSpec((4 * C, 1), lambda i: (0, 0))],
            out_specs=(pl.BlockSpec((G, C, T), lambda i: (i, 0, 0)),
                       pl.BlockSpec((G, C, L), lambda i: (i, 0, 0))),
            scratch_shapes=[pltpu.VMEM((2 * C, L), jnp.float32)]),
        compiler_params=pltpu.CompilerParams(
            dimension_semantics=("parallel",),
            vmem_limit_bytes=vmem_limit),
    )(x_in, w1, w2, b_all)

    if B_pad != B:
        res = res[:B]
        skip = skip[:B]
    return res, skip


def reference_numpy(x, params, dilation):
    """float64 NumPy reference with the same (documented) residual semantics."""
    x = np.asarray(x, np.float64)
    p = {k: np.asarray(v, np.float64) for k, v in params.items()}
    B, C, T = x.shape
    d = int(dilation)
    L = T + d
    xp = np.pad(x, ((0, 0), (0, 0), (d, d)))       # Conv1d padding=d on both sides

    def dilated_conv(w, b):
        y = (np.einsum('oi,bit->bot', w[:, :, 0], xp[:, :, 0:L]) +
             np.einsum('oi,bit->bot', w[:, :, 1], xp[:, :, d:d + L]))
        return y + b[None, :, None]

    def conv1x1(z, w, b):
        return np.einsum('oi,bit->bot', w[:, :, 0], z) + b[None, :, None]

    filt = np.tanh(dilated_conv(p["filter_w"], p["filter_b"]))
    gate = 1.0 / (1.0 + np.exp(-dilated_conv(p["gate_w"], p["gate_b"])))
    z = filt * gate
    residual = conv1x1(z, p["residual_w"], p["residual_b"])
    skip = conv1x1(z, p["skip_w"], p["skip_b"])
    res = x + residual[:, :, :T]
    return res, skip


if __name__ == "__main__":
    B, C, T, dilation = 2, 8, 16, 2
    key = jax.random.PRNGKey(0)
    keys = jax.random.split(key, 9)
    s2 = 1.0 / np.sqrt(C * 2)
    s1 = 1.0 / np.sqrt(C * 1)
    params = {
        "filter_w":   jax.random.normal(keys[0], (C, C, 2), jnp.float32) * s2,
        "filter_b":   jax.random.normal(keys[1], (C,),      jnp.float32) * s2,
        "gate_w":     jax.random.normal(keys[2], (C, C, 2), jnp.float32) * s2,
        "gate_b":     jax.random.normal(keys[3], (C,),      jnp.float32) * s2,
        "residual_w": jax.random.normal(keys[4], (C, C, 1), jnp.float32) * s1,
        "residual_b": jax.random.normal(keys[5], (C,),      jnp.float32) * s1,
        "skip_w":     jax.random.normal(keys[6], (C, C, 1), jnp.float32) * s1,
        "skip_b":     jax.random.normal(keys[7], (C,),      jnp.float32) * s1,
    }
    x = jax.random.normal(keys[8], (B, C, T), jnp.float32)

    res, skip = wavenet_block(x, params, dilation)
    jax.block_until_ready((res, skip))

    ref_res, ref_skip = reference_numpy(x, params, dilation)
    np.testing.assert_allclose(np.asarray(res), ref_res, rtol=1e-4, atol=1e-4)
    np.testing.assert_allclose(np.asarray(skip), ref_skip, rtol=1e-4, atol=1e-4)
    print("KERNEL_OK")
</pallas_src>

<mosaic_0001>
module attributes {stable_mosaic.version = 11 : i64} {
  func.func @wavenet_block_kernel(%arg0: i32, %arg1: memref<1x8x16xf32, #tpu.memory_space<vmem>>, %arg2: memref<16x16xf32, #tpu.memory_space<vmem>>, %arg3: memref<16x8xf32, #tpu.memory_space<vmem>>, %arg4: memref<32x1xf32, #tpu.memory_space<vmem>>, %arg5: memref<1x8x16xf32, #tpu.memory_space<vmem>>, %arg6: memref<1x8x18xf32, #tpu.memory_space<vmem>>, %arg7: memref<16x18xf32, #tpu.memory_space<vmem>>) attributes {dimension_semantics = [#tpu.dimension_semantics<parallel>], iteration_bounds = array<i64: 2>, scalar_prefetch = 0 : i64, scratch_operands = 1 : i64, tpu.core_type = #tpu.core_type<tc>, window_params = [{transform_indices = @transform_0, window_bounds = array<i64: 1, 8, 16>}, {pipeline_mode = #tpu.pipeline_mode<synchronous>, transform_indices = @transform_1, window_bounds = array<i64: 16, 16>}, {pipeline_mode = #tpu.pipeline_mode<synchronous>, transform_indices = @transform_2, window_bounds = array<i64: 16, 8>}, {pipeline_mode = #tpu.pipeline_mode<synchronous>, transform_indices = @transform_3, window_bounds = array<i64: 32, 1>}, {transform_indices = @transform_4, window_bounds = array<i64: 1, 8, 16>}, {transform_indices = @transform_5, window_bounds = array<i64: 1, 8, 18>}]} {
    %c0 = arith.constant 0 : index
    %c0_0 = arith.constant 0 : index
    %0 = vector.load %arg2[%c0, %c0_0] : memref<16x16xf32, #tpu.memory_space<vmem>>, vector<16x16xf32>
    %c0_1 = arith.constant 0 : index
    %c0_2 = arith.constant 0 : index
    %1 = vector.load %arg3[%c0_1, %c0_2] : memref<16x8xf32, #tpu.memory_space<vmem>>, vector<16x8xf32>
    %c0_3 = arith.constant 0 : index
    %c0_4 = arith.constant 0 : index
    %2 = vector.load %arg4[%c0_3, %c0_4] : memref<32x1xf32, #tpu.memory_space<vmem>>, vector<32x1xf32>
    %3 = vector.extract_strided_slice %2 {offsets = [0, 0], sizes = [8, 1], strides = [1, 1]} : vector<32x1xf32> to vector<8x1xf32>
    %4 = vector.extract_strided_slice %2 {offsets = [8, 0], sizes = [8, 1], strides = [1, 1]} : vector<32x1xf32> to vector<8x1xf32>
    %5 = vector.extract_strided_slice %2 {offsets = [16, 0], sizes = [8, 1], strides = [1, 1]} : vector<32x1xf32> to vector<8x1xf32>
    %6 = vector.extract_strided_slice %2 {offsets = [24, 0], sizes = [8, 1], strides = [1, 1]} : vector<32x1xf32> to vector<8x1xf32>
    %cst = arith.constant 0.000000e+00 : f32
    %7 = vector.broadcast %cst : f32 to vector<16x18xf32>
    %c0_5 = arith.constant 0 : index
    %c0_6 = arith.constant 0 : index
    %8 = vector.load %arg7[%c0_5, %c0_6] : memref<16x18xf32, #tpu.memory_space<vmem>>, vector<16x18xf32>
    tpu.vector_store %arg7[%c0_5, %c0_6], %7 {strides = array<i32>} : memref<16x18xf32, #tpu.memory_space<vmem>>, vector<16x18xf32>,
    %c0_7 = arith.constant 0 : index
    %c0_8 = arith.constant 0 : index
    %c0_9 = arith.constant 0 : index
    %9 = vector.load %arg1[%c0_7, %c0_8, %c0_9] : memref<1x8x16xf32, #tpu.memory_space<vmem>>, vector<1x8x16xf32>
    %10 = vector.shape_cast %9 : vector<1x8x16xf32> to vector<8x16xf32>
    %c0_10 = arith.constant 0 : index
    %c0_11 = arith.constant 0 : index
    %11 = vector.load %arg7[%c0_10, %c0_11] : memref<16x18xf32, #tpu.memory_space<vmem>>, vector<8x16xf32>
    tpu.vector_store %arg7[%c0_10, %c0_11], %10 {strides = array<i32>} : memref<16x18xf32, #tpu.memory_space<vmem>>, vector<8x16xf32>,
    %c8 = arith.constant 8 : index
    %c2 = arith.constant 2 : index
    %12 = vector.load %arg7[%c8, %c2] : memref<16x18xf32, #tpu.memory_space<vmem>>, vector<8x16xf32>
    tpu.vector_store %arg7[%c8, %c2], %10 {strides = array<i32>} : memref<16x18xf32, #tpu.memory_space<vmem>>, vector<8x16xf32>,
    %c0_12 = arith.constant 0 : index
    %c0_13 = arith.constant 0 : index
    %13 = vector.load %arg7[%c0_12, %c0_13] : memref<16x18xf32, #tpu.memory_space<vmem>>, vector<16x18xf32>
    %cst_14 = arith.constant dense<0.000000e+00> : vector<16x18xf32>
    %14 = tpu.matmul %0, %13, %cst_14 {dimension_numbers = #tpu.dot_dimension_numbers<[1], [0], [0], [1], [0, 0, 1, 1], [], []>} : vector<16x16xf32>, vector<16x18xf32>, vector<16x18xf32> -> vector<16x18xf32>
    %15 = vector.extract_strided_slice %14 {offsets = [0, 0], sizes = [8, 18], strides = [1, 1]} : vector<16x18xf32> to vector<8x18xf32>
    %16 = vector.broadcast %3 : vector<8x1xf32> to vector<8x18xf32>
    %17 = arith.addf %15, %16 : vector<8x18xf32>
    %18 = vector.extract_strided_slice %14 {offsets = [8, 0], sizes = [8, 18], strides = [1, 1]} : vector<16x18xf32> to vector<8x18xf32>
    %19 = vector.broadcast %4 : vector<8x1xf32> to vector<8x18xf32>
    %20 = arith.addf %18, %19 : vector<8x18xf32>
    %21 = math.tanh %17 : vector<8x18xf32>
    %cst_15 = arith.constant 5.000000e-01 : f32
    %22 = vector.broadcast %cst_15 : f32 to vector<8x18xf32>
    %23 = arith.mulf %22, %20 : vector<8x18xf32>
    %24 = math.tanh %23 : vector<8x18xf32>
    %cst_16 = arith.constant 5.000000e-01 : f32
    %25 = vector.broadcast %cst_16 : f32 to vector<8x18xf32>
    %26 = arith.mulf %25, %24 : vector<8x18xf32>
    %cst_17 = arith.constant 5.000000e-01 : f32
    %27 = vector.broadcast %cst_17 : f32 to vector<8x18xf32>
    %28 = arith.addf %26, %27 : vector<8x18xf32>
    %29 = arith.mulf %21, %28 : vector<8x18xf32>
    %cst_18 = arith.constant dense<0.000000e+00> : vector<16x18xf32>
    %30 = tpu.matmul %1, %29, %cst_18 {dimension_numbers = #tpu.dot_dimension_numbers<[1], [0], [0], [1], [0, 0, 1, 1], [], []>} : vector<16x8xf32>, vector<8x18xf32>, vector<16x18xf32> -> vector<16x18xf32>
    %31 = vector.extract_strided_slice %30 {offsets = [0, 0], sizes = [8, 16], strides = [1, 1]} : vector<16x18xf32> to vector<8x16xf32>
    %32 = arith.addf %10, %31 : vector<8x16xf32>
    %33 = vector.broadcast %5 : vector<8x1xf32> to vector<8x16xf32>
    %34 = arith.addf %32, %33 : vector<8x16xf32>
    %c0_19 = arith.constant 0 : index
    %c0_20 = arith.constant 0 : index
    %c0_21 = arith.constant 0 : index
    %35 = vector.load %arg5[%c0_19, %c0_20, %c0_21] : memref<1x8x16xf32, #tpu.memory_space<vmem>>, vector<1x8x16xf32>
    %36 = vector.shape_cast %35 : vector<1x8x16xf32> to vector<8x16xf32>
    %37 = vector.shape_cast %34 : vector<8x16xf32> to vector<1x8x16xf32>
    tpu.vector_store %arg5[%c0_19, %c0_20, %c0_21], %37 {strides = array<i32>} : memref<1x8x16xf32, #tpu.memory_space<vmem>>, vector<1x8x16xf32>,
    %38 = vector.extract_strided_slice %30 {offsets = [8, 0], sizes = [8, 18], strides = [1, 1]} : vector<16x18xf32> to vector<8x18xf32>
    %39 = vector.broadcast %6 : vector<8x1xf32> to vector<8x18xf32>
    %40 = arith.addf %38, %39 : vector<8x18xf32>
    %c0_22 = arith.constant 0 : index
    %c0_23 = arith.constant 0 : index
    %c0_24 = arith.constant 0 : index
    %41 = vector.load %arg6[%c0_22, %c0_23, %c0_24] : memref<1x8x18xf32, #tpu.memory_space<vmem>>, vector<1x8x18xf32>
    %42 = vector.shape_cast %41 : vector<1x8x18xf32> to vector<8x18xf32>
    %43 = vector.shape_cast %40 : vector<8x18xf32> to vector<1x8x18xf32>
    tpu.vector_store %arg6[%c0_22, %c0_23, %c0_24], %43 {strides = array<i32>} : memref<1x8x18xf32, #tpu.memory_space<vmem>>, vector<1x8x18xf32>,
    return
  }
  func.func @transform_0(%arg0: i32) -> (i32, i32, i32) {
    %c0_i32 = arith.constant 0 : i32
    %c0_i32_0 = arith.constant 0 : i32
    %c0_i32_1 = arith.constant 0 : i32
    return %arg0, %c0_i32, %c0_i32_0 : i32, i32, i32
  }
  func.func @transform_1(%arg0: i32) -> (i32, i32) {
    %c0_i32 = arith.constant 0 : i32
    %c0_i32_0 = arith.constant 0 : i32
    %c0_i32_1 = arith.constant 0 : i32
    return %c0_i32, %c0_i32_0 : i32, i32
  }
  func.func @transform_2(%arg0: i32) -> (i32, i32) {
    %c0_i32 = arith.constant 0 : i32
    %c0_i32_0 = arith.constant 0 : i32
    %c0_i32_1 = arith.constant 0 : i32
    return %c0_i32, %c0_i32_0 : i32, i32
  }
  func.func @transform_3(%arg0: i32) -> (i32, i32) {
    %c0_i32 = arith.constant 0 : i32
    %c0_i32_0 = arith.constant 0 : i32
    %c0_i32_1 = arith.constant 0 : i32
    return %c0_i32, %c0_i32_0 : i32, i32
  }
  func.func @transform_4(%arg0: i32) -> (i32, i32, i32) {
    %c0_i32 = arith.constant 0 : i32
    %c0_i32_0 = arith.constant 0 : i32
    %c0_i32_1 = arith.constant 0 : i32
    return %arg0, %c0_i32, %c0_i32_0 : i32, i32, i32
  }
  func.func @transform_5(%arg0: i32) -> (i32, i32, i32) {
    %c0_i32 = arith.constant 0 : i32
    %c0_i32_0 = arith.constant 0 : i32
    %c0_i32_1 = arith.constant 0 : i32
    return %arg0, %c0_i32, %c0_i32_0 : i32, i32, i32
  }
}

</mosaic_0001>

<llo_original>
// kernel: tpu_custom_call.1
$region0: #{tpu_custom_call.1}
  #allocation0 [shape = 'u32[]', space=smem, size = 0x4, offset = 0x4, fixed_abs, tag = 'smem constant byte address 0x4 - core index']
  #allocation1 [shape = 'u32[144,128]{1,0:T(1,128)}', space=vmem, size = 0x12000, scoped, tag = 'internal scratch']
  #allocation2 [shape = 'f32[16,18]{1,0:T(8,128)}', space=vmem, size = 0x2000, scoped, tag = 'scratch operand']
  %s0 = inlined_call_operand.vmem [shape: f32[2,8,16], index: 0, kind: input, shape index: {}]
  %s1 = inlined_call_operand.vmem [shape: f32[16,16], index: 1, kind: input, shape index: {}]
  %s2 = inlined_call_operand.vmem [shape: f32[16,8], index: 2, kind: input, shape index: {}]
  %s3 = inlined_call_operand.vmem [shape: f32[32,1], index: 3, kind: input, shape index: {}]
  %s4 = inlined_call_operand.hbm [shape: f32[2,8,16], index: 4, kind: output, shape index: {0}]
  %s5 = inlined_call_operand.hbm [shape: f32[2,8,18], index: 5, kind: output, shape index: {1}]
  %6 = xla_tuple %s4, %s5
  %s7 = sld [smem:[#allocation0]]
  $region57: #{tpu_custom_call.1} parent=0
    _
  %s9 = ssub.s32 1, %s7
  %s10 = scalar_select 0, %s9, %s7
  $region1: #{tpu_custom_call.1} parent=0
    #allocation3 [shape = 'u8[8192]{0}', space=vmem, size = 0x2000, scoped, tag = 'output window, operand 0']
    #allocation4 [shape = 's32[2]{0}', space=sflag, size = 0x8, scoped, tag = 'scoped memory for tpu_custom_call.1']
    #allocation5 [shape = 'u8[8192]{0}', space=vmem, size = 0x2000, scoped, tag = 'output window, operand 1']
    #allocation6 [shape = 's32[2]{0}', space=sflag, size = 0x8, scoped, tag = 'scoped memory for tpu_custom_call.1']
    %11 = vsyncpa [#allocation4], 0
    %s12 = scalar_lea.sflag [#allocation4], 1
    %13 = vsyncpa %s12, 0
    %14 = vsyncpa [#allocation6], 0
    %s15 = scalar_lea.sflag [#allocation6], 1
    %16 = vsyncpa %s15, 0
    loop: start=0, step=1, limit=4
    $region2: #{tpu_custom_call.1} parent=1 // loop_pre_header
      _
    $region3: #{tpu_custom_call.1} parent=1 // loop_header
      %s18 = sphi 0, %s22
      %p19 = scmp.ge.s32.totalorder %s18, 4
      %s28 = sphi 0, %s30
      %s31 = sphi 0, %s28
      %s32 = sphi 0, %s31
      %s48 = sphi 0, %s32
      %s52 = sphi 0, %s52
      %s54 = sphi 0, %s52
      %s55 = sphi 0, %s54
      %s69 = sphi 0, %s55
      %s73 = sphi 0, %s73
      %s75 = sphi 0, %s73
      %s76 = sphi 0, %s75
      %s90 = sphi 0, %s76
      %s94 = sphi 0, %s94
      %s96 = sphi 0, %s94
      %s97 = sphi 0, %s96
      %s111 = sphi 0, %s97
      %s117 = sphi 0, %s119
      %s120 = sphi 0, %s117
      %s121 = sphi 0, %s120
      %s137 = sphi 0, %s121
      %s143 = sphi 0, %s145
      %s146 = sphi 0, %s143
      %s147 = sphi 0, %s146
      %s163 = sphi 0, %s147
    $region4: #{tpu_custom_call.1} parent=1 // loop_header_branch
      %21 = sbr.rel (%p19) target = $region8
    $region5: #{tpu_custom_call.1} parent=1 // loop_body
      %s23 = ssub.s32 %s18, 1
      %s24 = ssub.s32 %s18, 2
      %s25 = sadd.s32 %s18, 1
      %s26 = ssub.s32 %s18, %s25
      %p27 = scmp.eq.s32.totalorder %s26, 0
      %s29 = sadd.s32 %s28, 1
      %s30 = scalar_select %p27, %s28, %s29
      %p33 = pneg %p27
      %p34 = scmp.eq.s32.totalorder %s18, 1
      %p35 = por %p33, %p34
      %p36 = scmp.ne.s32.totalorder %s28, %s31
      %p37 = scmp.eq.s32.totalorder %s18, 0
      %p38 = por %p36, %p37
      %p39 = scmp.ne.s32.totalorder %s28, %s31
      %p40 = scmp.eq.s32.totalorder %s23, 1
      %p41 = por %p39, %p40
      %p42 = scmp.ne.s32.totalorder %s31, %s32
      %p43 = scmp.eq.s32.totalorder %s23, 0
      %p44 = por %p42, %p43
      %p45 = scmp.ne.s32.totalorder %s31, %s32
      %p46 = scmp.eq.s32.totalorder %s24, 1
      %p47 = por %p45, %p46
      %p49 = scmp.ne.s32.totalorder %s32, %s48
      %p50 = scmp.eq.s32.totalorder %s24, 0
      %p51 = por %p49, %p50
      %s53 = sadd.s32 %s52, 1
      %p56 = scmp.eq.s32.totalorder %s18, 1
      %p57 = scmp.ne.s32.totalorder %s52, %s54
      %p58 = scmp.eq.s32.totalorder %s18, 0
      %p59 = por %p57, %p58
      %p60 = scmp.ne.s32.totalorder %s52, %s54
      %p61 = scmp.eq.s32.totalorder %s23, 1
      %p62 = por %p60, %p61
      %p63 = scmp.ne.s32.totalorder %s54, %s55
      %p64 = scmp.eq.s32.totalorder %s23, 0
      %p65 = por %p63, %p64
      %p66 = scmp.ne.s32.totalorder %s54, %s55
      %p67 = scmp.eq.s32.totalorder %s24, 1
      %p68 = por %p66, %p67
      %p70 = scmp.ne.s32.totalorder %s55, %s69
      %p71 = scmp.eq.s32.totalorder %s24, 0
      %p72 = por %p70, %p71
      %s74 = sadd.s32 %s73, 1
      %p77 = scmp.eq.s32.totalorder %s18, 1
      %p78 = scmp.ne.s32.totalorder %s73, %s75
      %p79 = scmp.eq.s32.totalorder %s18, 0
      %p80 = por %p78, %p79
      %p81 = scmp.ne.s32.totalorder %s73, %s75
      %p82 = scmp.eq.s32.totalorder %s23, 1
      %p83 = por %p81, %p82
      %p84 = scmp.ne.s32.totalorder %s75, %s76
      %p85 = scmp.eq.s32.totalorder %s23, 0
      %p86 = por %p84, %p85
      %p87 = scmp.ne.s32.totalorder %s75, %s76
      %p88 = scmp.eq.s32.totalorder %s24, 1
      %p89 = por %p87, %p88
      %p91 = scmp.ne.s32.totalorder %s76, %s90
      %p92 = scmp.eq.s32.totalorder %s24, 0
      %p93 = por %p91, %p92
      %s95 = sadd.s32 %s94, 1
      %p98 = scmp.eq.s32.totalorder %s18, 1
      %p99 = scmp.ne.s32.totalorder %s94, %s96
      %p100 = scmp.eq.s32.totalorder %s18, 0
      %p101 = por %p99, %p100
      %p102 = scmp.ne.s32.totalorder %s94, %s96
      %p103 = scmp.eq.s32.totalorder %s23, 1
      %p104 = por %p102, %p103
      %p105 = scmp.ne.s32.totalorder %s96, %s97
      %p106 = scmp.eq.s32.totalorder %s23, 0
      %p107 = por %p105, %p106
      %p108 = scmp.ne.s32.totalorder %s96, %s97
      %p109 = scmp.eq.s32.totalorder %s24, 1
      %p110 = por %p108, %p109
      %p112 = scmp.ne.s32.totalorder %s97, %s111
      %p113 = scmp.eq.s32.totalorder %s24, 0
      %p114 = por %p112, %p113
      %s115 = ssub.s32 %s18, %s25
      %p116 = scmp.eq.s32.totalorder %s115, 0
      %s118 = sadd.s32 %s117, 1
      %s119 = scalar_select %p116, %s117, %s118
      %p122 = pneg %p116
      %p123 = scmp.eq.s32.totalorder %s18, 1
      %p124 = por %p122, %p123
      %p125 = scmp.ne.s32.totalorder %s117, %s120
      %p126 = scmp.eq.s32.totalorder %s18, 0
      %p127 = por %p125, %p126
      %p128 = scmp.ne.s32.totalorder %s117, %s120
      %p129 = scmp.eq.s32.totalorder %s23, 1
      %p130 = por %p128, %p129
      %p131 = scmp.ne.s32.totalorder %s120, %s121
      %p132 = scmp.eq.s32.totalorder %s23, 0
      %p133 = por %p131, %p132
      %p134 = scmp.ne.s32.totalorder %s120, %s121
      %p135 = scmp.eq.s32.totalorder %s24, 1
      %p136 = por %p134, %p135
      %p138 = scmp.ne.s32.totalorder %s121, %s137
      %p139 = scmp.eq.s32.totalorder %s24, 0
      %p140 = por %p138, %p139
      %s141 = ssub.s32 %s18, %s25
      %p142 = scmp.eq.s32.totalorder %s141, 0
      %s144 = sadd.s32 %s143, 1
      %s145 = scalar_select %p142, %s143, %s144
      %p148 = pneg %p142
      %p149 = scmp.eq.s32.totalorder %s18, 1
      %p150 = por %p148, %p149
      %p151 = scmp.ne.s32.totalorder %s143, %s146
      %p152 = scmp.eq.s32.totalorder %s18, 0
      %p153 = por %p151, %p152
      %p154 = scmp.ne.s32.totalorder %s143, %s146
      %p155 = scmp.eq.s32.totalorder %s23, 1
      %p156 = por %p154, %p155
      %p157 = scmp.ne.s32.totalorder %s146, %s147
      %p158 = scmp.eq.s32.totalorder %s23, 0
      %p159 = por %p157, %p158
      %p160 = scmp.ne.s32.totalorder %s146, %s147
      %p161 = scmp.eq.s32.totalorder %s24, 1
      %p162 = por %p160, %p161
      %p164 = scmp.ne.s32.totalorder %s147, %s163
      %p165 = scmp.eq.s32.totalorder %s24, 0
      %p166 = por %p164, %p165
      %p167 = scmp.le.s32.totalorder 1, %s18
      %p168 = scmp.lt.s32.totalorder %s18, 3
      %p169 = pnand %p167, %p168
      %p170 = pneg %p169
      // Predicated region
      $region9: #{tpu_custom_call.1} parent=5 // pred_check
        _
      $region10: #{tpu_custom_call.1} parent=5 // pred_check_branch
        %172 = sbr.rel (%p169) target = $region12
      $region11: #{tpu_custom_call.1} parent=5 // pred_region
        %s173 = ssub.s32 %s18, 1
        // Predicated region
        $region13: #{tpu_custom_call.1} parent=11 // pred_check
          %p174 = pneg %p65
        $region14: #{tpu_custom_call.1} parent=11 // pred_check_branch
          %176 = sbr.rel (%p174) target = $region16
        $region15: #{tpu_custom_call.1} parent=11 // pred_region
          _
        $region16: #{tpu_custom_call.1} parent=11 // pred_fallthru
          _
        // Predicated region
        $region17: #{tpu_custom_call.1} parent=11 // pred_check
          %p177 = pneg %p86
        $region18: #{tpu_custom_call.1} parent=11 // pred_check_branch
          %179 = sbr.rel (%p177) target = $region20
        $region19: #{tpu_custom_call.1} parent=11 // pred_region
          _
        $region20: #{tpu_custom_call.1} parent=11 // pred_fallthru
          _
        // Predicated region
        $region21: #{tpu_custom_call.1} parent=11 // pred_check
          %p180 = pneg %p107
        $region22: #{tpu_custom_call.1} parent=11 // pred_check_branch
          %182 = sbr.rel (%p180) target = $region24
        $region23: #{tpu_custom_call.1} parent=11 // pred_region
          _
        $region24: #{tpu_custom_call.1} parent=11 // pred_fallthru
          _
      $region12: #{tpu_custom_call.1} parent=5 // pred_fallthru
        _
      %p183 = scmp.lt.s32.totalorder %s18, 2
      // Predicated region
      $region25: #{tpu_custom_call.1} parent=5 // pred_check
        %p184 = pneg %p183
      $region26: #{tpu_custom_call.1} parent=5 // pred_check_branch
        %186 = sbr.rel (%p184) target = $region28
      $region27: #{tpu_custom_call.1} parent=5 // pred_region
        // Predicated region
        $region29: #{tpu_custom_call.1} parent=27 // pred_check
          %p187 = pneg %p38
        $region30: #{tpu_custom_call.1} parent=27 // pred_check_branch
          %189 = sbr.rel (%p187) target = $region32
        $region31: #{tpu_custom_call.1} parent=27 // pred_region
          %p190 = scmp.lt.s32.totalorder %s18, 1
          %s191 = scalar_select %p190, %s18, 1
          %s192 = smul.addr %s191, 8
          %s193 = scalar_lea.vmem %s0, %s192
        $region32: #{tpu_custom_call.1} parent=27 // pred_fallthru
          _
      $region28: #{tpu_custom_call.1} parent=5 // pred_fallthru
        _
      %p194 = scmp.le.s32.totalorder 1, %s18
      %p195 = scmp.lt.s32.totalorder %s18, 3
      %p196 = pnand %p194, %p195
      %p197 = pneg %p196
      // Predicated region
      $region33: #{tpu_custom_call.1} parent=5 // pred_check
        _
      $region34: #{tpu_custom_call.1} parent=5 // pred_check_branch
        %199 = sbr.rel (%p196) target = $region36
      $region35: #{tpu_custom_call.1} parent=5 // pred_region
        %s200 = ssub.s32 %s18, 1
        %p201 = scmp.lt.s32.totalorder %s23, 1
        %s202 = scalar_select %p201, %s23, 1
        %s203 = smul.addr %s202, 8
        %s204 = scalar_lea.vmem %s0, %s203
        %p205 = pneg %p44
        %p206 = pneg %p41
        %p207 = pneg %p65
        %p208 = pneg %p62
        %p209 = pneg %p86
        %p210 = pneg %p83
        %p211 = pneg %p107
        %p212 = pneg %p104
        %p213 = pneg %p133
        %p214 = pneg %p130
        %s215 = sand.u32 %s120, 1
        %s216 = scalar_lea.sflag [#allocation4], %s215
        %s217 = sand.u32 %s120, 1
        %s218 = smul.addr %s217, 8
        %s219 = scalar_lea.vmem [#allocation3], %s218
        %p220 = pneg %p159
        %p221 = pneg %p156
        %s222 = sand.u32 %s146, 1
        %s223 = scalar_lea.sflag [#allocation6], %s222
        %s224 = sand.u32 %s146, 1
        %s225 = smul.addr %s224, 8
        %s226 = scalar_lea.vmem [#allocation5], %s225
        %p227 = scmp.lt.s32.totalorder %s23, 1
        %s228 = scalar_select %p227, %s23, 1
        %s229 = smul.addr %s228, 8
        %s230 = scalar_lea.vmem %s0, %s229
        %v231 = vld [vmem:[%s1] sm:$0xff]
        %v232 = vld [vmem:[%s1 + $0x8] sm:$0xff]
        %v233 = vld [vmem:[%s2] sm:$0xff]
        %v234 = vld [vmem:[%s2 + $0x8] sm:$0xff]
        %v235 = vld [vmem:[%s3] sm:$0xff]
        %v236 = vld [vmem:[%s3 + $0x8] sm:$0xff]
        %v237 = vld [vmem:[%s3 + $0x10] sm:$0xff]
        %v238 = vld [vmem:[%s3 + $0x18] sm:$0xff]
        %vm239 = vcmask 146432
        %240 = vst.msk [vmem:[#allocation2] sm:$0xff] %vm239, 0.0
        %241 = vst.msk [vmem:[#allocation2 + $0x8] sm:$0xff] %vm239, 0.0
        %v242 = vld [vmem:[%s230] sm:$0xff]
        %vm243 = vcmask 130048
        %244 = vst.msk [vmem:[#allocation2] sm:$0xff] %vm243, %v242
        %246 = vrot.lane.b32.xlu0 %v242, 2
        %v247 = vpop.permute.xlu0 %246
        %vm249 = vcmask 146448
        %250 = vst.msk [vmem:[#allocation2 + $0x8] sm:$0xff] %vm249, %v247
        %v251 = vld [vmem:[#allocation2] sm:$0xff]
        %v252 = vld [vmem:[#allocation2 + $0x8] sm:$0xff]
        %v254 = vsel %vm243, %v231, 0
        %v257 = vsel %vm243, %v232, 0
        %259 = vmatprep.subr.mxu0 0.0
        %260 = vmatpush1.msra.mxu0 %v251
        %261 = vmatprep.subr.mxu0 0.0
        %262 = vmatpush1.msra.mxu0 %v252
        %263 = vmatprep.subr.mxu0 0.0
        %264 = vmatpush1.msra.mxu0 0.0
        %265 = vmatprep.subr.mxu0 0.0
        %266 = vmatpush1.msra.mxu0 0.0
        %267 = vmatprep.subr.mxu0 0.0
        %268 = vmatpush1.msra.mxu0 0.0
        %269 = vmatprep.subr.mxu0 0.0
        %270 = vmatpush1.msra.mxu0 0.0
        %271 = vmatprep.subr.mxu0 0.0
        %272 = vmatpush1.msra.mxu0 0.0
        %273 = vmatprep.subr.mxu0 0.0
        %274 = vmatpush1.msra.mxu0 0.0
        %275 = vmatprep.subr.mxu0 0.0
        %276 = vmatpush1.msra.mxu0 0.0
        %277 = vmatprep.subr.mxu0 0.0
        %278 = vmatpush1.msra.mxu0 0.0
        %279 = vmatprep.subr.mxu0 0.0
        %280 = vmatpush1.msra.mxu0 0.0
        %281 = vmatprep.subr.mxu0 0.0
        %282 = vmatpush1.msra.mxu0 0.0
        %283 = vmatprep.subr.mxu0 0.0
        %284 = vmatpush1.msra.mxu0 0.0
        %285 = vmatprep.subr.mxu0 0.0
        %286 = vmatpush1.msra.mxu0 0.0
        %287 = vmatprep.subr.mxu0 0.0
        %288 = vmatpush1.msra.mxu0 0.0
        %289 = vmatprep.subr.mxu0 0.0
        %290 = vmatpush1.msra.mxu0 0.0
        %291 = vmatprep.subr.mxu0 0.0
        %292 = vmatpush1.msra.mxu0 0.0
        %293 = vmatprep.subr.mxu0 0.0
        %294 = vmatpush1.msra.mxu0 0.0
        %295 = vmatprep.subr.mxu0 0.0
        %296 = vmatpush1.msra.mxu0 0.0
        %297 = vmatprep.subr.mxu0 0.0
        %298 = vmatpush1.msra.mxu0 0.0
        %299 = vmatprep.subr.mxu0 0.0
        %300 = vmatpush1.msra.mxu0 0.0
        %301 = vmatprep.subr.mxu0 0.0
        %302 = vmatpush1.msra.mxu0 0.0
        %303 = vmatprep.subr.mxu0 0.0
        %304 = vmatpush1.msra.mxu0 0.0
        %305 = vmatprep.subr.mxu0 0.0
        %306 = vmatpush1.msra.mxu0 0.0
        %307 = vmatprep.subr.mxu0 0.0
        %308 = vmatpush1.msra.mxu0 0.0
        %309 = vmatprep.subr.mxu0 0.0
        %310 = vmatpush1.msra.mxu0 0.0
        %311 = vmatprep.subr.mxu0 0.0
        %312 = vmatpush1.msra.mxu0 0.0
        %313 = vmatprep.subr.mxu0 0.0
        %314 = vmatpush1.msra.mxu0 0.0
        %315 = vmatprep.subr.mxu0 0.0
        %316 = vmatpush1.msra.mxu0 0.0
        %317 = vmatprep.subr.mxu0 0.0
        %318 = vmatpush1.msra.mxu0 0.0
        %319 = vmatprep.subr.mxu0 0.0
        %320 = vmatpush1.msra.mxu0 0.0
        %321 = vmatprep.subr.mxu0 0.0
        %322 = vmatpush1.msra.mxu0 0.0
        %323 = vmatprep.mubr.f32.mxu0 0.0
        %324 = vmatmul.mubr.f32.gmra.mrb[0].mxu0 %v254
        %v325 = vpop.f32.mrb[0].mxu0
        %v326 = vadd.f32 0.0, %v325
        %v327 = vpop.f32.mrb[0].mxu0
        %328 = vmatprep.mubr.f32.mxu0 0.0
        %329 = vmatmul.mubr.f32.gmra.mrb[0].mxu0 %v257
        %v330 = vpop.f32.mrb[0].mxu0
        %v331 = vadd.f32 0.0, %v330
        %v332 = vpop.f32.mrb[0].mxu0
        %333 = vdwg.mxu0
        %335 = vset.pattern.permute.xlu0 0
        %336 = vperm.xlu0 %335, %v235
        %v337 = vpop.permute.xlu0 %336
        %v339 = vadd.f32 %v326, %v337
        %341 = vset.pattern.permute.xlu0 0
        %342 = vperm.xlu0 %341, %v236
        %v343 = vpop.permute.xlu0 %342
        %v345 = vadd.f32 %v331, %v343
        %v346 = vtanh.pop %v339
        %v347 = vmul.f32 %v345, 0.5
        %v348 = vtanh.pop %v347
        %v349 = vmul.f32 %v348, 0.5
        %v350 = vadd.f32 %v349, 0.5
        %v351 = vmul.f32 %v346, %v350
        %vm352 = vcmask 64512
        %v354 = vsel %vm352, %v233, 0
        %v357 = vsel %vm352, %v234, 0
        %359 = vmatprep.subr.mxu0 0.0
        %360 = vmatpush1.msra.mxu0 %v351
        %361 = vmatprep.subr.mxu0 0.0
        %362 = vmatpush1.msra.mxu0 0.0
        %363 = vmatprep.subr.mxu0 0.0
        %364 = vmatpush1.msra.mxu0 0.0
        %365 = vmatprep.subr.mxu0 0.0
        %366 = vmatpush1.msra.mxu0 0.0
        %367 = vmatprep.subr.mxu0 0.0
        %368 = vmatpush1.msra.mxu0 0.0
        %369 = vmatprep.subr.mxu0 0.0
        %370 = vmatpush1.msra.mxu0 0.0
        %371 = vmatprep.subr.mxu0 0.0
        %372 = vmatpush1.msra.mxu0 0.0
        %373 = vmatprep.subr.mxu0 0.0
        %374 = vmatpush1.msra.mxu0 0.0
        %375 = vmatprep.subr.mxu0 0.0
        %376 = vmatpush1.msra.mxu0 0.0
        %377 = vmatprep.subr.mxu0 0.0
        %378 = vmatpush1.msra.mxu0 0.0
        %379 = vmatprep.subr.mxu0 0.0
        %380 = vmatpush1.msra.mxu0 0.0
        %381 = vmatprep.subr.mxu0 0.0
        %382 = vmatpush1.msra.mxu0 0.0
        %383 = vmatprep.subr.mxu0 0.0
        %384 = vmatpush1.msra.mxu0 0.0
        %385 = vmatprep.subr.mxu0 0.0
        %386 = vmatpush1.msra.mxu0 0.0
        %387 = vmatprep.subr.mxu0 0.0
        %388 = vmatpush1.msra.mxu0 0.0
        %389 = vmatprep.subr.mxu0 0.0
        %390 = vmatpush1.msra.mxu0 0.0
        %391 = vmatprep.subr.mxu0 0.0
        %392 = vmatpush1.msra.mxu0 0.0
        %393 = vmatprep.subr.mxu0 0.0
        %394 = vmatpush1.msra.mxu0 0.0
        %395 = vmatprep.subr.mxu0 0.0
        %396 = vmatpush1.msra.mxu0 0.0
        %397 = vmatprep.subr.mxu0 0.0
        %398 = vmatpush1.msra.mxu0 0.0
        %399 = vmatprep.subr.mxu0 0.0
        %400 = vmatpush1.msra.mxu0 0.0
        %401 = vmatprep.subr.mxu0 0.0
        %402 = vmatpush1.msra.mxu0 0.0
        %403 = vmatprep.subr.mxu0 0.0
        %404 = vmatpush1.msra.mxu0 0.0
        %405 = vmatprep.subr.mxu0 0.0
        %406 = vmatpush1.msra.mxu0 0.0
        %407 = vmatprep.subr.mxu0 0.0
        %408 = vmatpush1.msra.mxu0 0.0
        %409 = vmatprep.subr.mxu0 0.0
        %410 = vmatpush1.msra.mxu0 0.0
        %411 = vmatprep.subr.mxu0 0.0
        %412 = vmatpush1.msra.mxu0 0.0
        %413 = vmatprep.subr.mxu0 0.0
        %414 = vmatpush1.msra.mxu0 0.0
        %415 = vmatprep.subr.mxu0 0.0
        %416 = vmatpush1.msra.mxu0 0.0
        %417 = vmatprep.subr.mxu0 0.0
        %418 = vmatpush1.msra.mxu0 0.0
        %419 = vmatprep.subr.mxu0 0.0
        %420 = vmatpush1.msra.mxu0 0.0
        %421 = vmatprep.subr.mxu0 0.0
        %422 = vmatpush1.msra.mxu0 0.0
        %423 = vmatprep.mubr.f32.mxu0 0.0
        %424 = vmatmul.mubr.f32.gmra.mrb[0].mxu0 %v354
        %v425 = vpop.f32.mrb[0].mxu0
        %v426 = vadd.f32 0.0, %v425
        %v427 = vpop.f32.mrb[0].mxu0
        %428 = vmatprep.mubr.f32.mxu0 0.0
        %429 = vmatmul.mubr.f32.gmra.mrb[0].mxu0 %v357
        %v430 = vpop.f32.mrb[0].mxu0
        %v431 = vadd.f32 0.0, %v430
        %v432 = vpop.f32.mrb[0].mxu0
        %433 = vdwg.mxu0
        %v434 = vadd.f32 %v242, %v426
        %436 = vset.pattern.permute.xlu0 0
        %437 = vperm.xlu0 %436, %v237
        %v438 = vpop.permute.xlu0 %437
        %v440 = vadd.f32 %v434, %v438
        %441 = vst.msk [vmem:[%s219] sm:$0xff] %vm243, %v440
        %443 = vset.pattern.permute.xlu0 0
        %444 = vperm.xlu0 %443, %v238
        %v445 = vpop.permute.xlu0 %444
        %v447 = vadd.f32 %v431, %v445
        %448 = vst.msk [vmem:[%s226] sm:$0xff] %vm239, %v447
        %s449 = sand.u32 %s120, 1
        %s450 = scalar_lea.sflag [#allocation4], %s449
        %s451 = sand.u32 %s120, 1
        %s452 = smul.addr %s451, 8
        %s453 = scalar_lea.vmem [#allocation3], %s452
        %s454 = sand.u32 %s146, 1
        %s455 = scalar_lea.sflag [#allocation6], %s454
        %s456 = sand.u32 %s146, 1
        %s457 = smul.addr %s456, 8
        %s458 = scalar_lea.vmem [#allocation5], %s457
        // Predicated region
        $region37: #{tpu_custom_call.1} parent=35 // pred_check
          %p459 = pneg %p130
        $region38: #{tpu_custom_call.1} parent=35 // pred_check_branch
          %461 = sbr.rel (%p459) target = $region40
        $region39: #{tpu_custom_call.1} parent=35 // pred_region
          %s463 = ssub.s32 128, 128
          %464 = vsyncadd %s450, %s463
          %s465 = smul.addr %s23, 128
          %s466 = scalar_lea.hbm %s4, %s465
          %s468 = sshll.u32 %s453, 4
          %s469 = int_to_ptr.vmem [resolvable:$true] %s468
          %471 = dma.vmem_to_hbm [thread:$0]  %s469, 128, %s466, %s450
        $region40: #{tpu_custom_call.1} parent=35 // pred_fallthru
          _
        // Predicated region
        $region41: #{tpu_custom_call.1} parent=35 // pred_check
          %p472 = pneg %p156
        $region42: #{tpu_custom_call.1} parent=35 // pred_check_branch
          %474 = sbr.rel (%p472) target = $region44
        $region43: #{tpu_custom_call.1} parent=35 // pred_region
          %s476 = ssub.s32 128, 128
          %477 = vsyncadd %s455, %s476
          %s478 = smul.addr %s23, 128
          %s479 = scalar_lea.hbm %s5, %s478
          %s481 = sshll.u32 %s458, 4
          %s482 = int_to_ptr.vmem [resolvable:$true] %s481
          %484 = dma.vmem_to_hbm [thread:$0]  %s482, 128, %s479, %s455
        $region44: #{tpu_custom_call.1} parent=35 // pred_fallthru
          _
      $region36: #{tpu_custom_call.1} parent=5 // pred_fallthru
        _
      %p485 = scmp.le.s32.totalorder 2, %s18
      // Predicated region
      $region45: #{tpu_custom_call.1} parent=5 // pred_check
        %p486 = pneg %p485
      $region46: #{tpu_custom_call.1} parent=5 // pred_check_branch
        %488 = sbr.rel (%p486) target = $region48
      $region47: #{tpu_custom_call.1} parent=5 // pred_region
        %s489 = ssub.s32 %s18, 2
        // Predicated region
        $region49: #{tpu_custom_call.1} parent=47 // pred_check
          %p490 = pneg %p136
        $region50: #{tpu_custom_call.1} parent=47 // pred_check_branch
          %492 = sbr.rel (%p490) target = $region52
        $region51: #{tpu_custom_call.1} parent=47 // pred_region
          %s493 = sand.u32 %s121, 1
          %s494 = scalar_lea.sflag [#allocation4], %s493
          %s495 = sand.u32 %s121, 1
          %s496 = smul.addr %s495, 8
          %s497 = scalar_lea.vmem [#allocation3], %s496
          %498 = dma.done %s494, 128
        $region52: #{tpu_custom_call.1} parent=47 // pred_fallthru
          _
        // Predicated region
        $region53: #{tpu_custom_call.1} parent=47 // pred_check
          %p499 = pneg %p162
        $region54: #{tpu_custom_call.1} parent=47 // pred_check_branch
          %501 = sbr.rel (%p499) target = $region56
        $region55: #{tpu_custom_call.1} parent=47 // pred_region
          %s502 = sand.u32 %s147, 1
          %s503 = scalar_lea.sflag [#allocation6], %s502
          %s504 = sand.u32 %s147, 1
          %s505 = smul.addr %s504, 8
          %s506 = scalar_lea.vmem [#allocation5], %s505
          %507 = dma.done %s503, 128
        $region56: #{tpu_custom_call.1} parent=47 // pred_fallthru
          _
      $region48: #{tpu_custom_call.1} parent=5 // pred_fallthru
        _
    $region6: #{tpu_custom_call.1} parent=1 // loop_footer
      %s22 = sadd.s32 1, %s18
    $region7: #{tpu_custom_call.1} parent=1 // loop_footer_branch
      %17 = sbr.rel target = $region3
    $region8: #{tpu_custom_call.1} parent=1 // loop_exit
      _
    %508 = vsyncpa [#allocation4], 1
    %s509 = scalar_lea.sflag [#allocation4], 1
    %510 = vsyncpa %s509, 1
    %511 = vsyncpa [#allocation6], 1
    %s512 = scalar_lea.sflag [#allocation6], 1
    %513 = vsyncpa %s512, 1

</llo_original>
